<compile_context>
chip_gen: v6e
topology: v6e:2x2x1
jax: 0.10.0
libtpu: 0.0.40
codegen_flags: <defaults>
</compile_context>

<pallas_src>
import numpy as np
import jax
import jax.numpy as jnp
from jax import lax
from jax.experimental import pallas as pl
from jax.experimental.pallas import tpu as pltpu


def init_weights_bias(size_in, size_out):
    """Deterministic re-implementation of OcclusionFirstLayer.init_weights_bias."""
    weights = np.zeros((size_out, size_in), dtype=np.float32)
    bias = np.zeros((size_out,), dtype=np.float32)
    block_size = size_out // 4
    for i in range(4):
        if i == 0 or i == 2:
            for j in range(block_size):
                weights[i * block_size + j, i] = 1.0
                bias[i * block_size + j] = -(j + 1)
        elif i == 1 or i == 3:
            for j in range(block_size):
                weights[i * block_size + j, i - 1] = -1.0
                weights[i * block_size + j, i] = -1.0
                bias[i * block_size + j] = j + 2
    return jnp.asarray(weights), jnp.asarray(bias)


LANE = 128


def prepack_occlusion_params(weights, bias):
    """One-time repack of (W, b) into a lane-dense block-diagonal form.

    M[g*size_in + k, g*size_out + o] = W[o, k]   for G = 128 // size_out groups
    b_packed[0, g*size_out + o]      = bias[o]
    """
    w = np.asarray(weights, dtype=np.float32)      # (size_out, size_in)
    b = np.asarray(bias, dtype=np.float32)         # (size_out,)
    size_out, size_in = w.shape
    if size_out <= LANE and LANE % size_out == 0:
        G = LANE // size_out
    else:
        G = 1  # TODO(synk): for size_out not dividing 128, also pad Np to a lane multiple.
    Kp, Np = G * size_in, G * size_out
    M = np.zeros((Kp, Np), dtype=np.float32)
    wt = w.T                                       # (size_in, size_out)
    for g in range(G):
        M[g * size_in:(g + 1) * size_in, g * size_out:(g + 1) * size_out] = wt
    b_packed = np.tile(b, G).reshape(1, Np)
    return jnp.asarray(M), jnp.asarray(b_packed), G


def occlusion_packed_kernel(x_ref, m_ref, b_ref, o_ref):
    # x_ref: (bt, Kp)       VMEM  -- packed batch rows (G original rows per packed row)
    # m_ref: (Kp, Np=128)   VMEM  -- block-diagonal repacked W^T
    # b_ref: (1, Np)        VMEM  -- packed bias row
    # o_ref: (bt, Np)       VMEM  -- lane-dense output (unmasked full-lane stores)
    o_ref[...] = (
        jnp.dot(x_ref[...], m_ref[...],
                preferred_element_type=jnp.float32,
                precision=lax.Precision.HIGHEST)
        + b_ref[...]
    )


def _round_up(x, m):
    return (x + m - 1) // m * m


def occlusion_first_layer_batched(xb, M, b_packed, G, *, rows_per_block=512):
    """xb: (B, size_in) -> (B, size_out); row b equals W @ xb[b] + bias."""
    B, size_in = xb.shape
    Kp, Np = M.shape
    size_out = Np // G
    assert Kp == G * size_in

    # Pack G consecutive batch rows into one lane-dense packed row.
    R = -(-B // G)                              # packed rows needed
    R_pad = _round_up(max(R, 1), 8)             # sublane alignment
    bt = min(rows_per_block, R_pad)             # big tiles amortize per-step overhead
    R_pad = _round_up(R_pad, bt)
    grid = R_pad // bt

    xb_f = xb.astype(jnp.float32)
    pad_rows = R_pad * G - B
    if pad_rows:
        xb_f = jnp.concatenate(
            [xb_f, jnp.zeros((pad_rows, size_in), jnp.float32)], axis=0)
    xf = xb_f.reshape(R_pad, Kp)                # free row-major view

    y2 = pl.pallas_call(
        occlusion_packed_kernel,
        out_shape=jax.ShapeDtypeStruct((R_pad, Np), jnp.float32),
        grid_spec=pltpu.PrefetchScalarGridSpec(
            num_scalar_prefetch=0,
            grid=(grid,),
            in_specs=[
                pl.BlockSpec((bt, Kp), lambda i: (i, 0)),
                pl.BlockSpec((Kp, Np), lambda i: (0, 0)),
                pl.BlockSpec((1, Np), lambda i: (0, 0)),
            ],
            out_specs=pl.BlockSpec((bt, Np), lambda i: (i, 0)),
        ),
        compiler_params=pltpu.CompilerParams(
            dimension_semantics=("parallel",),   # megacore sharding on v7x
        ),
    )(xf, M, b_packed)

    y = y2.reshape(R_pad * G, size_out)
    return y[:B]


def occlusion_first_layer(x, M, b_packed, G):
    """Exact module forward: x (size_in,) -> (size_out,).

    Routed through the batched kernel; a dedicated matvec pallas_call costs more in
    dispatch than the <100 cycles of compute it would save.
    """
    return occlusion_first_layer_batched(x.reshape(1, -1), M, b_packed, G)[0]


if __name__ == "__main__":
    # The layer's structured init indexes columns 0..3, so size_in = 4.
    size_in, size_out = 4, 32

    weights, bias = init_weights_bias(size_in, size_out)
    # One-time repack (feedback: precompute at init, not per call).
    M, b_packed, G = prepack_occlusion_params(weights, bias)

    w_np = np.asarray(weights)
    b_np = np.asarray(bias)

    key = jax.random.PRNGKey(0)
    k1, k2, k3 = jax.random.split(key, 3)

    # --- single vector (exact module semantics) ---
    x = jax.random.normal(k1, (size_in,), dtype=jnp.float32)
    y = jax.block_until_ready(occlusion_first_layer(x, M, b_packed, G))
    y_ref = w_np @ np.asarray(x) + b_np
    np.testing.assert_allclose(np.asarray(y), y_ref, rtol=1e-5, atol=1e-5)

    # --- batched, small B handled as a single lane-dense block ---
    B = 16
    xb = jax.random.normal(k2, (B, size_in), dtype=jnp.float32)
    yb = jax.block_until_ready(occlusion_first_layer_batched(xb, M, b_packed, G))
    yb_ref = np.asarray(xb) @ w_np.T + b_np[None, :]
    np.testing.assert_allclose(np.asarray(yb), yb_ref, rtol=1e-5, atol=1e-5)

    # --- batched, ragged B (exercises zero-padding of groups and sublanes) ---
    B2 = 37
    xb2 = jax.random.normal(k3, (B2, size_in), dtype=jnp.float32)
    yb2 = jax.block_until_ready(occlusion_first_layer_batched(xb2, M, b_packed, G))
    yb2_ref = np.asarray(xb2) @ w_np.T + b_np[None, :]
    np.testing.assert_allclose(np.asarray(yb2), yb2_ref, rtol=1e-5, atol=1e-5)

    # --- batched with a multi-step grid (small rows_per_block just to exercise the
    #     pipelined / "parallel" grid path at demo scale; production default is 512) ---
    B3 = 64
    xb3 = jax.random.normal(k2, (B3, size_in), dtype=jnp.float32)
    yb3 = jax.block_until_ready(
        occlusion_first_layer_batched(xb3, M, b_packed, G, rows_per_block=8))
    yb3_ref = np.asarray(xb3) @ w_np.T + b_np[None, :]
    np.testing.assert_allclose(np.asarray(yb3), yb3_ref, rtol=1e-5, atol=1e-5)

    print("KERNEL_OK")
</pallas_src>

<mosaic_0001>
module attributes {stable_mosaic.version = 11 : i64} {
  func.func @occlusion_packed_kernel(%arg0: i32, %arg1: memref<8x16xf32, #tpu.memory_space<vmem>>, %arg2: memref<16x128xf32, #tpu.memory_space<vmem>>, %arg3: memref<1x128xf32, #tpu.memory_space<vmem>>, %arg4: memref<8x128xf32, #tpu.memory_space<vmem>>) attributes {dimension_semantics = [#tpu.dimension_semantics<parallel>], iteration_bounds = array<i64: 1>, scalar_prefetch = 0 : i64, scratch_operands = 0 : i64, tpu.core_type = #tpu.core_type<tc>, window_params = [{transform_indices = @transform_0, window_bounds = array<i64: 8, 16>}, {pipeline_mode = #tpu.pipeline_mode<synchronous>, transform_indices = @transform_1, window_bounds = array<i64: 16, 128>}, {pipeline_mode = #tpu.pipeline_mode<synchronous>, transform_indices = @transform_2, window_bounds = array<i64: 1, 128>}, {transform_indices = @transform_3, window_bounds = array<i64: 8, 128>}]} {
    %c0 = arith.constant 0 : index
    %c0_0 = arith.constant 0 : index
    %0 = vector.load %arg1[%c0, %c0_0] : memref<8x16xf32, #tpu.memory_space<vmem>>, vector<8x16xf32>
    %c0_1 = arith.constant 0 : index
    %c0_2 = arith.constant 0 : index
    %1 = vector.load %arg2[%c0_1, %c0_2] : memref<16x128xf32, #tpu.memory_space<vmem>>, vector<16x128xf32>
    %cst = arith.constant dense<0.000000e+00> : vector<8x128xf32>
    %2 = tpu.matmul %0, %1, %cst {dimension_numbers = #tpu.dot_dimension_numbers<[1], [0], [0], [1], [0, 0, 1, 1], [], []>, precision = #tpu.contract_precision<fp32>} : vector<8x16xf32>, vector<16x128xf32>, vector<8x128xf32> -> vector<8x128xf32>
    %c0_3 = arith.constant 0 : index
    %c0_4 = arith.constant 0 : index
    %3 = vector.load %arg3[%c0_3, %c0_4] : memref<1x128xf32, #tpu.memory_space<vmem>>, vector<1x128xf32>
    %4 = vector.broadcast %3 : vector<1x128xf32> to vector<8x128xf32>
    %5 = arith.addf %2, %4 : vector<8x128xf32>
    %c0_5 = arith.constant 0 : index
    %c0_6 = arith.constant 0 : index
    %6 = vector.load %arg4[%c0_5, %c0_6] : memref<8x128xf32, #tpu.memory_space<vmem>>, vector<8x128xf32>
    tpu.vector_store %arg4[%c0_5, %c0_6], %5 {strides = array<i32>} : memref<8x128xf32, #tpu.memory_space<vmem>>, vector<8x128xf32>,
    return
  }
  func.func @transform_0(%arg0: i32) -> (i32, i32) {
    %c0_i32 = arith.constant 0 : i32
    %c0_i32_0 = arith.constant 0 : i32
    return %arg0, %c0_i32 : i32, i32
  }
  func.func @transform_1(%arg0: i32) -> (i32, i32) {
    %c0_i32 = arith.constant 0 : i32
    %c0_i32_0 = arith.constant 0 : i32
    %c0_i32_1 = arith.constant 0 : i32
    return %c0_i32, %c0_i32_0 : i32, i32
  }
  func.func @transform_2(%arg0: i32) -> (i32, i32) {
    %c0_i32 = arith.constant 0 : i32
    %c0_i32_0 = arith.constant 0 : i32
    %c0_i32_1 = arith.constant 0 : i32
    return %c0_i32, %c0_i32_0 : i32, i32
  }
  func.func @transform_3(%arg0: i32) -> (i32, i32) {
    %c0_i32 = arith.constant 0 : i32
    %c0_i32_0 = arith.constant 0 : i32
    return %arg0, %c0_i32 : i32, i32
  }
}

</mosaic_0001>

<llo_original>
// kernel: tpu_custom_call.1
$region0: #{tpu_custom_call.1}
  #allocation0 [shape = 'u32[]', space=smem, size = 0x4, offset = 0x4, fixed_abs, tag = 'smem constant byte address 0x4 - core index']
  #allocation1 [shape = 'u32[144,128]{1,0:T(1,128)}', space=vmem, size = 0x12000, scoped, tag = 'internal scratch']
  %s0 = inlined_call_operand.hbm [shape: f32[8,16], index: 0, kind: input, shape index: {}]
  %s1 = inlined_call_operand.hbm [shape: f32[16,128], index: 1, kind: input, shape index: {}]
  %s2 = inlined_call_operand.vmem [shape: f32[1,128], index: 2, kind: input, shape index: {}]
  %s3 = inlined_call_operand.hbm [shape: f32[8,128], index: 3, kind: output, shape index: {}]
  %s4 = sld [smem:[#allocation0]]
  $region30: #{tpu_custom_call.1} parent=0
    _
  %s6 = ssub.s32 1, %s4
  %s7 = scalar_select 0, %s6, %s4
  $region1: #{tpu_custom_call.1} parent=0
    #allocation2 [shape = 'u8[4096]{0}', space=vmem, size = 0x1000, scoped, tag = 'input window, operand 0, single buffered']
    #allocation3 [shape = 's32[1]{0}', space=sflag, size = 0x4, scoped, tag = 'scoped memory for tpu_custom_call.1']
    #allocation4 [shape = 's32[1]{0}', space=sflag, size = 0x4, scoped, tag = 'scoped memory for tpu_custom_call.1']
    #allocation5 [shape = 'u8[8192]{0}', space=vmem, size = 0x2000, scoped, tag = 'input window, operand 1, single buffered']
    #allocation6 [shape = 's32[1]{0}', space=sflag, size = 0x4, scoped, tag = 'scoped memory for tpu_custom_call.1']
    #allocation7 [shape = 'u8[4096]{0}', space=vmem, size = 0x1000, scoped, tag = 'output window, operand 0, single buffered']
    %8 = vsyncpa [#allocation3], 0
    %9 = vsyncpa [#allocation6], 0
    %10 = vsyncpa [#allocation4], 0
    // Predicated region
    $region2: #{tpu_custom_call.1} parent=1 // pred_check
      _
    $region3: #{tpu_custom_call.1} parent=1 // pred_check_branch
      %12 = sbr.rel (0) target = $region5
    $region4: #{tpu_custom_call.1} parent=1 // pred_region
      %s14 = ssub.s32 128, 128
      %15 = vsyncadd [#allocation3], %s14
      %s17 = sshll.u32 [#allocation2], 4
      %s18 = int_to_ptr.vmem [resolvable:$true] %s17
      %20 = dma.hbm_to_vmem [thread:$0]  %s0, 128, %s18, [#allocation3]
    $region5: #{tpu_custom_call.1} parent=1 // pred_fallthru
      _
    // Predicated region
    $region6: #{tpu_custom_call.1} parent=1 // pred_check
      _
    $region7: #{tpu_custom_call.1} parent=1 // pred_check_branch
      %22 = sbr.rel (0) target = $region9
    $region8: #{tpu_custom_call.1} parent=1 // pred_region
      %s24 = ssub.s32 256, 256
      %25 = vsyncadd [#allocation6], %s24
      %s26 = sshll.u32 [#allocation5], 4
      %s27 = int_to_ptr.vmem [resolvable:$true] %s26
      %32 = dma.hbm_to_vmem [thread:$0]  %s1, 256, %s27, [#allocation6], 128, 128, 8
    $region9: #{tpu_custom_call.1} parent=1 // pred_fallthru
      _
    // Predicated region
    $region10: #{tpu_custom_call.1} parent=1 // pred_check
      _
    $region11: #{tpu_custom_call.1} parent=1 // pred_check_branch
      %34 = sbr.rel (0) target = $region13
    $region12: #{tpu_custom_call.1} parent=1 // pred_region
      _
    $region13: #{tpu_custom_call.1} parent=1 // pred_fallthru
      _
    // Predicated region
    $region14: #{tpu_custom_call.1} parent=1 // pred_check
      _
    $region15: #{tpu_custom_call.1} parent=1 // pred_check_branch
      %36 = sbr.rel (0) target = $region17
    $region16: #{tpu_custom_call.1} parent=1 // pred_region
      %37 = dma.done [#allocation3], 128
    $region17: #{tpu_custom_call.1} parent=1 // pred_fallthru
      _
    // Predicated region
    $region18: #{tpu_custom_call.1} parent=1 // pred_check
      _
    $region19: #{tpu_custom_call.1} parent=1 // pred_check_branch
      %39 = sbr.rel (0) target = $region21
    $region20: #{tpu_custom_call.1} parent=1 // pred_region
      %40 = dma.done [#allocation6], 256
    $region21: #{tpu_custom_call.1} parent=1 // pred_fallthru
      _
    %v41 = vld [vmem:[#allocation2] sm:$0xff]
    %v42 = vld [vmem:[#allocation5] sm:$0xff]
    %v43 = vld [vmem:[#allocation5 + $0x8] sm:$0xff]
    %v44 = vld [vmem:[%s2] sm:$0x1]
    %v46 = vlaneseq
    %v47 = vshrl.u32 %v46, 7
    %v48 = vsub.s32 0, %v47
    %v49 = vrot.slane %v44, %v48
    %vm51 = vcmask 130048
    %v53 = vsel %vm51, %v41, 0
    %55 = vmatprep.subr.mxu0 0.0
    %56 = vmatpush1.msra.mxu0 0.0
    %57 = vmatprep.subr.mxu0 0.0
    %58 = vmatpush1.msra.mxu0 0.0
    %59 = vmatprep.subr.mxu0 0.0
    %60 = vmatpush1.msra.mxu0 0.0
    %61 = vmatprep.subr.mxu0 0.0
    %62 = vmatpush1.msra.mxu0 0.0
    %63 = vmatprep.subr.mxu0 0.0
    %64 = vmatpush1.msra.mxu0 0.0
    %65 = vmatprep.subr.mxu0 0.0
    %66 = vmatpush1.msra.mxu0 0.0
    %67 = vmatprep.subr.mxu0 0.0
    %68 = vmatpush1.msra.mxu0 0.0
    %69 = vmatprep.subr.mxu0 0.0
    %70 = vmatpush1.msra.mxu0 0.0
    %71 = vmatprep.subr.mxu0 0.0
    %72 = vmatpush1.msra.mxu0 0.0
    %73 = vmatprep.subr.mxu0 0.0
    %74 = vmatpush1.msra.mxu0 0.0
    %75 = vmatprep.subr.mxu0 0.0
    %76 = vmatpush1.msra.mxu0 0.0
    %77 = vmatprep.subr.mxu0 0.0
    %78 = vmatpush1.msra.mxu0 0.0
    %79 = vmatprep.subr.mxu0 0.0
    %80 = vmatpush1.msra.mxu0 0.0
    %81 = vmatprep.subr.mxu0 0.0
    %82 = vmatpush1.msra.mxu0 0.0
    %83 = vmatprep.subr.mxu0 0.0
    %v84 = vand.u32 %v43, 4294901760
    %85 = vmatpush1.msra.mxu0 %v84
    %86 = vmatprep.subr.mxu0 0.0
    %v87 = vand.u32 %v42, 4294901760
    %88 = vmatpush1.msra.mxu0 %v87
    %89 = vmatprep.subr.mxu0 0.0
    %90 = vmatpush2.msra.mxu0 0.0
    %91 = vmatprep.subr.mxu0 0.0
    %92 = vmatpush2.msra.mxu0 0.0
    %93 = vmatprep.subr.mxu0 0.0
    %94 = vmatpush2.msra.mxu0 0.0
    %95 = vmatprep.subr.mxu0 0.0
    %96 = vmatpush2.msra.mxu0 0.0
    %97 = vmatprep.subr.mxu0 0.0
    %98 = vmatpush2.msra.mxu0 0.0
    %99 = vmatprep.subr.mxu0 0.0
    %100 = vmatpush2.msra.mxu0 0.0
    %101 = vmatprep.subr.mxu0 0.0
    %102 = vmatpush2.msra.mxu0 0.0
    %103 = vmatprep.subr.mxu0 0.0
    %104 = vmatpush2.msra.mxu0 0.0
    %105 = vmatprep.subr.mxu0 0.0
    %106 = vmatpush2.msra.mxu0 0.0
    %107 = vmatprep.subr.mxu0 0.0
    %108 = vmatpush2.msra.mxu0 0.0
    %109 = vmatprep.subr.mxu0 0.0
    %110 = vmatpush2.msra.mxu0 0.0
    %111 = vmatprep.subr.mxu0 0.0
    %112 = vmatpush2.msra.mxu0 0.0
    %113 = vmatprep.subr.mxu0 0.0
    %114 = vmatpush2.msra.mxu0 0.0
    %115 = vmatprep.subr.mxu0 0.0
    %116 = vmatpush2.msra.mxu0 0.0
    %117 = vmatprep.subr.mxu0 0.0
    %118 = vmatpush2.msra.mxu0 0.0
    %119 = vmatprep.subr.mxu0 0.0
    %120 = vmatpush2.msra.mxu0 0.0
    %121 = vmatprep.mubr.f32.mxu0 0.0
    %v122 = vand.u32 %v53, 4294901760
    %v123 = vsub.f32 %v53, %v122
    %v124 = vand.u32 %v123, 4294901760
    %v125 = vsub.f32 %v123, %v124
    %v126 = vand.u32 %v125, 4294901760
    %127 = vmatmul.mubr.f32.gmra.mxu0 %v126
    %v128 = vpop.f32.mrf.mxu0
    %v129 = vadd.f32 %v49, %v128
    %v130 = vpop.f32.mrf.mxu0
    %131 = vdwg.mxu0
    %132 = vmatprep.subr.mxu0 0.0
    %133 = vmatpush1.msra.mxu0 0.0
    %134 = vmatprep.subr.mxu0 0.0
    %135 = vmatpush1.msra.mxu0 0.0
    %136 = vmatprep.subr.mxu0 0.0
    %137 = vmatpush1.msra.mxu0 0.0
    %138 = vmatprep.subr.mxu0 0.0
    %139 = vmatpush1.msra.mxu0 0.0
    %140 = vmatprep.subr.mxu0 0.0
    %141 = vmatpush1.msra.mxu0 0.0
    %142 = vmatprep.subr.mxu0 0.0
    %143 = vmatpush1.msra.mxu0 0.0
    %144 = vmatprep.subr.mxu0 0.0
    %145 = vmatpush1.msra.mxu0 0.0
    %146 = vmatprep.subr.mxu0 0.0
    %147 = vmatpush1.msra.mxu0 0.0
    %148 = vmatprep.subr.mxu0 0.0
    %149 = vmatpush1.msra.mxu0 0.0
    %150 = vmatprep.subr.mxu0 0.0
    %151 = vmatpush1.msra.mxu0 0.0
    %152 = vmatprep.subr.mxu0 0.0
    %153 = vmatpush1.msra.mxu0 0.0
    %154 = vmatprep.subr.mxu0 0.0
    %155 = vmatpush1.msra.mxu0 0.0
    %156 = vmatprep.subr.mxu0 0.0
    %157 = vmatpush1.msra.mxu0 0.0
    %158 = vmatprep.subr.mxu0 0.0
    %159 = vmatpush1.msra.mxu0 0.0
    %160 = vmatprep.subr.mxu0 0.0
    %v161 = vand.u32 %v43, 4294901760
    %v162 = vsub.f32 %v43, %v161
    %v163 = vand.u32 %v162, 4294901760
    %v164 = vsub.f32 %v162, %v163
    %v165 = vand.u32 %v164, 4294901760
    %166 = vmatpush1.msra.mxu0 %v165
    %167 = vmatprep.subr.mxu0 0.0
    %v168 = vand.u32 %v42, 4294901760
    %v169 = vsub.f32 %v42, %v168
    %v170 = vand.u32 %v169, 4294901760
    %v171 = vsub.f32 %v169, %v170
    %v172 = vand.u32 %v171, 4294901760
    %173 = vmatpush1.msra.mxu0 %v172
    %174 = vmatprep.subr.mxu0 0.0
    %175 = vmatpush2.msra.mxu0 0.0
    %176 = vmatprep.subr.mxu0 0.0
    %177 = vmatpush2.msra.mxu0 0.0
    %178 = vmatprep.subr.mxu0 0.0
    %179 = vmatpush2.msra.mxu0 0.0
    %180 = vmatprep.subr.mxu0 0.0
    %181 = vmatpush2.msra.mxu0 0.0
    %182 = vmatprep.subr.mxu0 0.0
    %183 = vmatpush2.msra.mxu0 0.0
    %184 = vmatprep.subr.mxu0 0.0
    %185 = vmatpush2.msra.mxu0 0.0
    %186 = vmatprep.subr.mxu0 0.0
    %187 = vmatpush2.msra.mxu0 0.0
    %188 = vmatprep.subr.mxu0 0.0
    %189 = vmatpush2.msra.mxu0 0.0
    %190 = vmatprep.subr.mxu0 0.0
    %191 = vmatpush2.msra.mxu0 0.0
    %192 = vmatprep.subr.mxu0 0.0
    %193 = vmatpush2.msra.mxu0 0.0
    %194 = vmatprep.subr.mxu0 0.0
    %195 = vmatpush2.msra.mxu0 0.0
    %196 = vmatprep.subr.mxu0 0.0
    %197 = vmatpush2.msra.mxu0 0.0
    %198 = vmatprep.subr.mxu0 0.0
    %199 = vmatpush2.msra.mxu0 0.0
    %200 = vmatprep.subr.mxu0 0.0
    %201 = vmatpush2.msra.mxu0 0.0
    %202 = vmatprep.subr.mxu0 0.0
    %203 = vmatpush2.msra.mxu0 0.0
    %204 = vmatprep.subr.mxu0 0.0
    %205 = vmatpush2.msra.mxu0 0.0
    %206 = vmatprep.mubr.f32.mxu0 0.0
    %v207 = vand.u32 %v53, 4294901760
    %208 = vmatmul.mubr.f32.gmra.mxu0 %v207
    %v209 = vpop.f32.mrf.mxu0
    %v210 = vadd.f32 %v129, %v209
    %v211 = vpop.f32.mrf.mxu0
    %212 = vdwg.mxu0
    %213 = vmatprep.subr.mxu0 0.0
    %214 = vmatpush1.msra.mxu0 0.0
    %215 = vmatprep.subr.mxu0 0.0
    %216 = vmatpush1.msra.mxu0 0.0
    %217 = vmatprep.subr.mxu0 0.0
    %218 = vmatpush1.msra.mxu0 0.0
    %219 = vmatprep.subr.mxu0 0.0
    %220 = vmatpush1.msra.mxu0 0.0
    %221 = vmatprep.subr.mxu0 0.0
    %222 = vmatpush1.msra.mxu0 0.0
    %223 = vmatprep.subr.mxu0 0.0
    %224 = vmatpush1.msra.mxu0 0.0
    %225 = vmatprep.subr.mxu0 0.0
    %226 = vmatpush1.msra.mxu0 0.0
    %227 = vmatprep.subr.mxu0 0.0
    %228 = vmatpush1.msra.mxu0 0.0
    %229 = vmatprep.subr.mxu0 0.0
    %230 = vmatpush1.msra.mxu0 0.0
    %231 = vmatprep.subr.mxu0 0.0
    %232 = vmatpush1.msra.mxu0 0.0
    %233 = vmatprep.subr.mxu0 0.0
    %234 = vmatpush1.msra.mxu0 0.0
    %235 = vmatprep.subr.mxu0 0.0
    %236 = vmatpush1.msra.mxu0 0.0
    %237 = vmatprep.subr.mxu0 0.0
    %238 = vmatpush1.msra.mxu0 0.0
    %239 = vmatprep.subr.mxu0 0.0
    %240 = vmatpush1.msra.mxu0 0.0
    %241 = vmatprep.subr.mxu0 0.0
    %v242 = vand.u32 %v43, 4294901760
    %v243 = vsub.f32 %v43, %v242
    %244 = vmatpush1.msra.mxu0 %v243
    %245 = vmatprep.subr.mxu0 0.0
    %v246 = vand.u32 %v42, 4294901760
    %v247 = vsub.f32 %v42, %v246
    %248 = vmatpush1.msra.mxu0 %v247
    %249 = vmatprep.subr.mxu0 0.0
    %250 = vmatpush2.msra.mxu0 0.0
    %251 = vmatprep.subr.mxu0 0.0
    %252 = vmatpush2.msra.mxu0 0.0
    %253 = vmatprep.subr.mxu0 0.0
    %254 = vmatpush2.msra.mxu0 0.0
    %255 = vmatprep.subr.mxu0 0.0
    %256 = vmatpush2.msra.mxu0 0.0
    %257 = vmatprep.subr.mxu0 0.0
    %258 = vmatpush2.msra.mxu0 0.0
    %259 = vmatprep.subr.mxu0 0.0
    %260 = vmatpush2.msra.mxu0 0.0
    %261 = vmatprep.subr.mxu0 0.0
    %262 = vmatpush2.msra.mxu0 0.0
    %263 = vmatprep.subr.mxu0 0.0
    %264 = vmatpush2.msra.mxu0 0.0
    %265 = vmatprep.subr.mxu0 0.0
    %266 = vmatpush2.msra.mxu0 0.0
    %267 = vmatprep.subr.mxu0 0.0
    %268 = vmatpush2.msra.mxu0 0.0
    %269 = vmatprep.subr.mxu0 0.0
    %270 = vmatpush2.msra.mxu0 0.0
    %271 = vmatprep.subr.mxu0 0.0
    %272 = vmatpush2.msra.mxu0 0.0
    %273 = vmatprep.subr.mxu0 0.0
    %274 = vmatpush2.msra.mxu0 0.0
    %275 = vmatprep.subr.mxu0 0.0
    %276 = vmatpush2.msra.mxu0 0.0
    %277 = vmatprep.subr.mxu0 0.0
    %278 = vmatpush2.msra.mxu0 0.0
    %279 = vmatprep.subr.mxu0 0.0
    %280 = vmatpush2.msra.mxu0 0.0
    %281 = vmatprep.mubr.f32.mxu0 0.0
    %v282 = vand.u32 %v53, 4294901760
    %v283 = vsub.f32 %v53, %v282
    %284 = vmatmul.mubr.f32.gmra.mxu0 %v283
    %v285 = vpop.f32.mrf.mxu0
    %v286 = vadd.f32 %v210, %v285
    %v287 = vpop.f32.mrf.mxu0
    %288 = vdwg.mxu0
    %289 = vmatprep.subr.mxu0 0.0
    %290 = vmatpush1.msra.mxu0 0.0
    %291 = vmatprep.subr.mxu0 0.0
    %292 = vmatpush1.msra.mxu0 0.0
    %293 = vmatprep.subr.mxu0 0.0
    %294 = vmatpush1.msra.mxu0 0.0
    %295 = vmatprep.subr.mxu0 0.0
    %296 = vmatpush1.msra.mxu0 0.0
    %297 = vmatprep.subr.mxu0 0.0
    %298 = vmatpush1.msra.mxu0 0.0
    %299 = vmatprep.subr.mxu0 0.0
    %300 = vmatpush1.msra.mxu0 0.0
    %301 = vmatprep.subr.mxu0 0.0
    %302 = vmatpush1.msra.mxu0 0.0
    %303 = vmatprep.subr.mxu0 0.0
    %304 = vmatpush1.msra.mxu0 0.0
    %305 = vmatprep.subr.mxu0 0.0
    %306 = vmatpush1.msra.mxu0 0.0
    %307 = vmatprep.subr.mxu0 0.0
    %308 = vmatpush1.msra.mxu0 0.0
    %309 = vmatprep.subr.mxu0 0.0
    %310 = vmatpush1.msra.mxu0 0.0
    %311 = vmatprep.subr.mxu0 0.0
    %312 = vmatpush1.msra.mxu0 0.0
    %313 = vmatprep.subr.mxu0 0.0
    %314 = vmatpush1.msra.mxu0 0.0
    %315 = vmatprep.subr.mxu0 0.0
    %316 = vmatpush1.msra.mxu0 0.0
    %317 = vmatprep.subr.mxu0 0.0
    %v318 = vand.u32 %v43, 4294901760
    %319 = vmatpush1.msra.mxu0 %v318
    %320 = vmatprep.subr.mxu0 0.0
    %v321 = vand.u32 %v42, 4294901760
    %322 = vmatpush1.msra.mxu0 %v321
    %323 = vmatprep.subr.mxu0 0.0
    %324 = vmatpush2.msra.mxu0 0.0
    %325 = vmatprep.subr.mxu0 0.0
    %326 = vmatpush2.msra.mxu0 0.0
    %327 = vmatprep.subr.mxu0 0.0
    %328 = vmatpush2.msra.mxu0 0.0
    %329 = vmatprep.subr.mxu0 0.0
    %330 = vmatpush2.msra.mxu0 0.0
    %331 = vmatprep.subr.mxu0 0.0
    %332 = vmatpush2.msra.mxu0 0.0
    %333 = vmatprep.subr.mxu0 0.0
    %334 = vmatpush2.msra.mxu0 0.0
    %335 = vmatprep.subr.mxu0 0.0
    %336 = vmatpush2.msra.mxu0 0.0
    %337 = vmatprep.subr.mxu0 0.0
    %338 = vmatpush2.msra.mxu0 0.0
    %339 = vmatprep.subr.mxu0 0.0
    %340 = vmatpush2.msra.mxu0 0.0
    %341 = vmatprep.subr.mxu0 0.0
    %342 = vmatpush2.msra.mxu0 0.0
    %343 = vmatprep.subr.mxu0 0.0
    %344 = vmatpush2.msra.mxu0 0.0
    %345 = vmatprep.subr.mxu0 0.0
    %346 = vmatpush2.msra.mxu0 0.0
    %347 = vmatprep.subr.mxu0 0.0
    %348 = vmatpush2.msra.mxu0 0.0
    %349 = vmatprep.subr.mxu0 0.0
    %350 = vmatpush2.msra.mxu0 0.0
    %351 = vmatprep.subr.mxu0 0.0
    %352 = vmatpush2.msra.mxu0 0.0
    %353 = vmatprep.subr.mxu0 0.0
    %354 = vmatpush2.msra.mxu0 0.0
    %355 = vmatprep.mubr.f32.mxu0 0.0
    %v356 = vand.u32 %v53, 4294901760
    %v357 = vsub.f32 %v53, %v356
    %v358 = vand.u32 %v357, 4294901760
    %359 = vmatmul.mubr.f32.gmra.mxu0 %v358
    %v360 = vpop.f32.mrf.mxu0
    %v361 = vadd.f32 %v286, %v360
    %v362 = vpop.f32.mrf.mxu0
    %363 = vdwg.mxu0
    %364 = vmatprep.subr.mxu0 0.0
    %365 = vmatpush1.msra.mxu0 0.0
    %366 = vmatprep.subr.mxu0 0.0
    %367 = vmatpush1.msra.mxu0 0.0
    %368 = vmatprep.subr.mxu0 0.0
    %369 = vmatpush1.msra.mxu0 0.0
    %370 = vmatprep.subr.mxu0 0.0
    %371 = vmatpush1.msra.mxu0 0.0
    %372 = vmatprep.subr.mxu0 0.0
    %373 = vmatpush1.msra.mxu0 0.0
    %374 = vmatprep.subr.mxu0 0.0
    %375 = vmatpush1.msra.mxu0 0.0
    %376 = vmatprep.subr.mxu0 0.0
    %377 = vmatpush1.msra.mxu0 0.0
    %378 = vmatprep.subr.mxu0 0.0
    %379 = vmatpush1.msra.mxu0 0.0
    %380 = vmatprep.subr.mxu0 0.0
    %381 = vmatpush1.msra.mxu0 0.0
    %382 = vmatprep.subr.mxu0 0.0
    %383 = vmatpush1.msra.mxu0 0.0
    %384 = vmatprep.subr.mxu0 0.0
    %385 = vmatpush1.msra.mxu0 0.0
    %386 = vmatprep.subr.mxu0 0.0
    %387 = vmatpush1.msra.mxu0 0.0
    %388 = vmatprep.subr.mxu0 0.0
    %389 = vmatpush1.msra.mxu0 0.0
    %390 = vmatprep.subr.mxu0 0.0
    %391 = vmatpush1.msra.mxu0 0.0
    %392 = vmatprep.subr.mxu0 0.0
    %v393 = vand.u32 %v43, 4294901760
    %v394 = vsub.f32 %v43, %v393
    %v395 = vand.u32 %v394, 4294901760
    %396 = vmatpush1.msra.mxu0 %v395
    %397 = vmatprep.subr.mxu0 0.0
    %v398 = vand.u32 %v42, 4294901760
    %v399 = vsub.f32 %v42, %v398
    %v400 = vand.u32 %v399, 4294901760
    %401 = vmatpush1.msra.mxu0 %v400
    %402 = vmatprep.subr.mxu0 0.0
    %403 = vmatpush2.msra.mxu0 0.0
    %404 = vmatprep.subr.mxu0 0.0
    %405 = vmatpush2.msra.mxu0 0.0
    %406 = vmatprep.subr.mxu0 0.0
    %407 = vmatpush2.msra.mxu0 0.0
    %408 = vmatprep.subr.mxu0 0.0
    %409 = vmatpush2.msra.mxu0 0.0
    %410 = vmatprep.subr.mxu0 0.0
    %411 = vmatpush2.msra.mxu0 0.0
    %412 = vmatprep.subr.mxu0 0.0
    %413 = vmatpush2.msra.mxu0 0.0
    %414 = vmatprep.subr.mxu0 0.0
    %415 = vmatpush2.msra.mxu0 0.0
    %416 = vmatprep.subr.mxu0 0.0
    %417 = vmatpush2.msra.mxu0 0.0
    %418 = vmatprep.subr.mxu0 0.0
    %419 = vmatpush2.msra.mxu0 0.0
    %420 = vmatprep.subr.mxu0 0.0
    %421 = vmatpush2.msra.mxu0 0.0
    %422 = vmatprep.subr.mxu0 0.0
    %423 = vmatpush2.msra.mxu0 0.0
    %424 = vmatprep.subr.mxu0 0.0
    %425 = vmatpush2.msra.mxu0 0.0
    %426 = vmatprep.subr.mxu0 0.0
    %427 = vmatpush2.msra.mxu0 0.0
    %428 = vmatprep.subr.mxu0 0.0
    %429 = vmatpush2.msra.mxu0 0.0
    %430 = vmatprep.subr.mxu0 0.0
    %431 = vmatpush2.msra.mxu0 0.0
    %432 = vmatprep.subr.mxu0 0.0
    %433 = vmatpush2.msra.mxu0 0.0
    %434 = vmatprep.mubr.f32.mxu0 0.0
    %v435 = vand.u32 %v53, 4294901760
    %436 = vmatmul.mubr.f32.gmra.mxu0 %v435
    %v437 = vpop.f32.mrf.mxu0
    %v438 = vadd.f32 %v361, %v437
    %v439 = vpop.f32.mrf.mxu0
    %440 = vdwg.mxu0
    %441 = vmatprep.subr.mxu0 0.0
    %442 = vmatpush1.msra.mxu0 0.0
    %443 = vmatprep.subr.mxu0 0.0
    %444 = vmatpush1.msra.mxu0 0.0
    %445 = vmatprep.subr.mxu0 0.0
    %446 = vmatpush1.msra.mxu0 0.0
    %447 = vmatprep.subr.mxu0 0.0
    %448 = vmatpush1.msra.mxu0 0.0
    %449 = vmatprep.subr.mxu0 0.0
    %450 = vmatpush1.msra.mxu0 0.0
    %451 = vmatprep.subr.mxu0 0.0
    %452 = vmatpush1.msra.mxu0 0.0
    %453 = vmatprep.subr.mxu0 0.0
    %454 = vmatpush1.msra.mxu0 0.0
    %455 = vmatprep.subr.mxu0 0.0
    %456 = vmatpush1.msra.mxu0 0.0
    %457 = vmatprep.subr.mxu0 0.0
    %458 = vmatpush1.msra.mxu0 0.0
    %459 = vmatprep.subr.mxu0 0.0
    %460 = vmatpush1.msra.mxu0 0.0
    %461 = vmatprep.subr.mxu0 0.0
    %462 = vmatpush1.msra.mxu0 0.0
    %463 = vmatprep.subr.mxu0 0.0
    %464 = vmatpush1.msra.mxu0 0.0
    %465 = vmatprep.subr.mxu0 0.0
    %466 = vmatpush1.msra.mxu0 0.0
    %467 = vmatprep.subr.mxu0 0.0
    %468 = vmatpush1.msra.mxu0 0.0
    %469 = vmatprep.subr.mxu0 0.0
    %v470 = vand.u32 %v43, 4294901760
    %471 = vmatpush1.msra.mxu0 %v470
    %472 = vmatprep.subr.mxu0 0.0
    %v473 = vand.u32 %v42, 4294901760
    %474 = vmatpush1.msra.mxu0 %v473
    %475 = vmatprep.subr.mxu0 0.0
    %476 = vmatpush2.msra.mxu0 0.0
    %477 = vmatprep.subr.mxu0 0.0
    %478 = vmatpush2.msra.mxu0 0.0
    %479 = vmatprep.subr.mxu0 0.0
    %480 = vmatpush2.msra.mxu0 0.0
    %481 = vmatprep.subr.mxu0 0.0
    %482 = vmatpush2.msra.mxu0 0.0
    %483 = vmatprep.subr.mxu0 0.0
    %484 = vmatpush2.msra.mxu0 0.0
    %485 = vmatprep.subr.mxu0 0.0
    %486 = vmatpush2.msra.mxu0 0.0
    %487 = vmatprep.subr.mxu0 0.0
    %488 = vmatpush2.msra.mxu0 0.0
    %489 = vmatprep.subr.mxu0 0.0
    %490 = vmatpush2.msra.mxu0 0.0
    %491 = vmatprep.subr.mxu0 0.0
    %492 = vmatpush2.msra.mxu0 0.0
    %493 = vmatprep.subr.mxu0 0.0
    %494 = vmatpush2.msra.mxu0 0.0
    %495 = vmatprep.subr.mxu0 0.0
    %496 = vmatpush2.msra.mxu0 0.0
    %497 = vmatprep.subr.mxu0 0.0
    %498 = vmatpush2.msra.mxu0 0.0
    %499 = vmatprep.subr.mxu0 0.0
    %500 = vmatpush2.msra.mxu0 0.0
    %501 = vmatprep.subr.mxu0 0.0
    %502 = vmatpush2.msra.mxu0 0.0
    %503 = vmatprep.subr.mxu0 0.0
    %504 = vmatpush2.msra.mxu0 0.0
    %505 = vmatprep.subr.mxu0 0.0
    %506 = vmatpush2.msra.mxu0 0.0
    %507 = vmatprep.mubr.f32.mxu0 0.0
    %v508 = vand.u32 %v53, 4294901760
    %509 = vmatmul.mubr.f32.gmra.mxu0 %v508
    %v510 = vpop.f32.mrf.mxu0
    %v511 = vadd.f32 %v438, %v510
    %v512 = vpop.f32.mrf.mxu0
    %513 = vdwg.mxu0
    %514 = vst [vmem:[#allocation7] sm:$0xff] %v511
    // Predicated region
    $region22: #{tpu_custom_call.1} parent=1 // pred_check
      _
    $region23: #{tpu_custom_call.1} parent=1 // pred_check_branch
      %516 = sbr.rel (0) target = $region25
    $region24: #{tpu_custom_call.1} parent=1 // pred_region
      %s518 = ssub.s32 128, 128
      %519 = vsyncadd [#allocation4], %s518
      %s521 = sshll.u32 [#allocation7], 4
      %s522 = int_to_ptr.vmem [resolvable:$true] %s521
      %524 = dma.vmem_to_hbm [thread:$0]  %s522, 128, %s3, [#allocation4]
    $region25: #{tpu_custom_call.1} parent=1 // pred_fallthru
      _
    // Predicated region
    $region26: #{tpu_custom_call.1} parent=1 // pred_check
      _
    $region27: #{tpu_custom_call.1} parent=1 // pred_check_branch
      %526 = sbr.rel (0) target = $region29
    $region28: #{tpu_custom_call.1} parent=1 // pred_region
      %527 = dma.done [#allocation4], 128
    $region29: #{tpu_custom_call.1} parent=1 // pred_fallthru
      _
    %528 = vsyncpa [#allocation3], 1
    %529 = vsyncpa [#allocation6], 1
    %530 = vsyncpa [#allocation4], 1

</llo_original>
